<compile_context>
chip_gen: v7x
topology: tpu7x:2x2x1
jax: 0.10.0
libtpu: 0.0.40
codegen_flags: <defaults>
</compile_context>

<pallas_src>
import jax
import jax.numpy as jnp
from jax.experimental import pallas as pl
from jax.experimental.pallas import tpu as pltpu

LANE = 128              # vreg lane width: every load is fully lane-dense
SUBLANE = 8
MAX_BLOCK_ROWS = 8192   # 8192 x 128 x 4 B = 4 MiB per f32 input block / step
FAST_PATH_ROWS = 4096   # <= 2 MiB per f32 input -> single-block fast path
MIB = 1024 * 1024


def _round_up(x: int, m: int) -> int:
    return ((x + m - 1) // m) * m


# --------------------------------------------------------------------------
# Kernels
# --------------------------------------------------------------------------
def _l1_small_kernel(p_ref, t_ref, o_ref):
    """Single-block path: whole (rows, 128) slab reduced to one (1, 128) row."""
    diff = p_ref[...].astype(jnp.float32) - t_ref[...].astype(jnp.float32)
    o_ref[...] = jnp.sum(jnp.abs(diff), axis=0, keepdims=True)


def _make_l1_stream_kernel(rows: int, tm: int, steps: int, needs_mask: bool):
    """Streaming path: accumulate sum(|p - t|) into an (8, 128) VMEM tile."""

    def kernel(p_ref, t_ref, o_ref, acc_ref):
        s = pl.program_id(1)

        @pl.when(s == 0)
        def _():
            acc_ref[...] = jnp.zeros_like(acc_ref)

        diff = p_ref[...].astype(jnp.float32) - t_ref[...].astype(jnp.float32)
        a = jnp.abs(diff)
        if needs_mask:
            # Zero out rows past the true extent (ragged last block / padding
            # introduced only by block rounding -- never materialized in HBM).
            gidx = pl.program_id(0) * steps + s
            row_ids = gidx * tm + jax.lax.broadcasted_iota(
                jnp.int32, (tm, LANE), 0)
            a = jnp.where(row_ids < rows, a, 0.0)

        # (tm, 128) -> (tm//8, 8, 128) is tile-aligned (free); reducing the
        # untiled leading axis is pure VPU vreg adds, hidden under the DMA.
        acc_ref[...] += jnp.sum(a.reshape(tm // SUBLANE, SUBLANE, LANE), axis=0)

        @pl.when(s == pl.num_programs(1) - 1)
        def _():
            o_ref[...] = acc_ref[...]

    return kernel


# --------------------------------------------------------------------------
# Wrapper
# --------------------------------------------------------------------------
def _input_spec(tm: int, steps: int, last_block: int, clamp: bool):
    if clamp:
        idx = lambda p, s: (jnp.minimum(p * steps + s, last_block), 0)
    else:
        idx = lambda p, s: (p * steps + s, 0)
    try:
        # 3-deep input buffering covers prologue/epilogue + DMA-issue jitter
        # (most visible on v7x); footprint checked against VMEM below.
        return pl.BlockSpec((tm, LANE), idx, pipeline_mode=pl.Buffered(3)), 3
    except Exception:
        return pl.BlockSpec((tm, LANE), idx), 2


def l1_loss(preds: jax.Array, images: jax.Array) -> jax.Array:
    """mean(|preds - images|), same semantics as torch.nn.L1Loss()."""
    assert preds.shape == images.shape, "preds/images shape mismatch"
    n = preds.size
    if n == 0:
        return jnp.float32(0.0)

    p_flat = preds.reshape(-1)
    t_flat = images.reshape(-1)

    rows = n // LANE                 # full lane-dense rows
    n_main = rows * LANE
    pair_bytes = preds.dtype.itemsize + images.dtype.itemsize

    # <128-element ragged lane tail: summed directly in JAX (at most 127
    # elements) instead of padding/copying both inputs in HBM.
    tail_sum = jnp.float32(0.0)
    if n_main < n:
        # TODO(synk): for non-%128 sizes the head slice below may copy once;
        # typical image shapes (N*C*H*W % 128 == 0) take the copy-free path.
        pt = p_flat[n_main:].astype(jnp.float32)
        tt = t_flat[n_main:].astype(jnp.float32)
        tail_sum = jnp.sum(jnp.abs(pt - tt))

    inv_n = 1.0 / n
    if rows == 0:
        return (tail_sum * inv_n).astype(jnp.float32)

    if n_main < n:
        p_head, t_head = p_flat[:n_main], t_flat[:n_main]
    else:
        p_head, t_head = p_flat, t_flat
    p2d = p_head.reshape(rows, LANE)
    t2d = t_head.reshape(rows, LANE)

    # ---------------- small-input fast path: one block, one step ----------
    if rows <= FAST_PATH_ROWS:
        block_bytes = rows * LANE * pair_bytes
        vmem_limit = int(min(48 * MIB, max(16 * MIB, 2 * block_bytes + 4 * MIB)))
        partial = pl.pallas_call(
            _l1_small_kernel,
            out_shape=jax.ShapeDtypeStruct((1, LANE), jnp.float32),
            grid=(1,),
            in_specs=[pl.BlockSpec((rows, LANE), lambda i: (0, 0))] * 2,
            out_specs=pl.BlockSpec((1, LANE), lambda i: (0, 0)),
            compiler_params=pltpu.CompilerParams(
                dimension_semantics=("arbitrary",),
                vmem_limit_bytes=vmem_limit,
            ),
        )(p2d, t2d)
        return ((jnp.sum(partial) + tail_sum) * inv_n).astype(jnp.float32)

    # ---------------- streaming path: (parallel, arbitrary) grid ----------
    # Leading size-2 "parallel" axis lets v7x's two TensorCores each stream a
    # contiguous half; near-free on single-TC v5e/v6e (one extra tiny flush).
    # TODO(synk): verify on xprof that both v7x TCs engage; if not, switch the
    # leading axis to pltpu.CORE_PARALLEL.
    p_parts = 2
    blocks = _round_up(max(p_parts, pl.cdiv(rows, MAX_BLOCK_ROWS)), p_parts)
    tm = _round_up(pl.cdiv(rows, blocks), SUBLANE)        # multiple of 8
    steps = blocks // p_parts
    needs_mask = blocks * tm != rows
    last_block = (rows - 1) // tm

    in_spec, n_buf = _input_spec(tm, steps, last_block, clamp=needs_mask)
    block_bytes = tm * LANE * pair_bytes
    # Actual footprint (inputs x buffers) + slack; stays well under v7x's
    # 64 MiB per-TC VMEM (<= ~30 MiB for f32 inputs).
    vmem_limit = int(min(48 * MIB, max(16 * MIB, n_buf * block_bytes + 6 * MIB)))

    partials = pl.pallas_call(
        _make_l1_stream_kernel(rows, tm, steps, needs_mask),
        out_shape=jax.ShapeDtypeStruct((p_parts * SUBLANE, LANE), jnp.float32),
        grid_spec=pltpu.PrefetchScalarGridSpec(
            num_scalar_prefetch=0,
            grid=(p_parts, steps),
            in_specs=[in_spec, in_spec],
            out_specs=pl.BlockSpec((SUBLANE, LANE), lambda p, s: (p, 0)),
            scratch_shapes=[pltpu.VMEM((SUBLANE, LANE), jnp.float32)],
        ),
        compiler_params=pltpu.CompilerParams(
            dimension_semantics=("parallel", "arbitrary"),
            vmem_limit_bytes=vmem_limit,
        ),
    )(p2d, t2d)

    # Tiny final combine of the lane partials + mean scaling.
    return ((jnp.sum(partials) + tail_sum) * inv_n).astype(jnp.float32)


if __name__ == "__main__":
    key = jax.random.PRNGKey(0)
    k1, k2 = jax.random.split(key)
    preds = jax.random.uniform(k1, (2, 4, 16, 16), dtype=jnp.float32)
    images = jax.random.uniform(k2, (2, 4, 16, 16), dtype=jnp.float32)

    loss = jax.block_until_ready(l1_loss(preds, images))
    ref = jnp.mean(jnp.abs(preds - images))
    assert loss.shape == ()
    assert abs(float(loss) - float(ref)) < 1e-5, (float(loss), float(ref))

    # Exercise the streaming / masked / ragged-tail paths as well.
    for shape in [(2, 4, 384, 384),   # streaming path (2 blocks, parallel split)
                  (8193, 128),        # streaming path with ragged-row masking
                  (5, 5, 5, 5)]:      # <128-element lane tail handled in JAX
        ka, kb = jax.random.split(jax.random.PRNGKey(1))
        a = jax.random.uniform(ka, shape, dtype=jnp.float32)
        b = jax.random.uniform(kb, shape, dtype=jnp.float32)
        got = jax.block_until_ready(l1_loss(a, b))
        want = jnp.mean(jnp.abs(a - b))
        assert abs(float(got) - float(want)) < 1e-5, (shape, float(got), float(want))

    print("KERNEL_OK")
</pallas_src>

<mosaic_0001>
module attributes {stable_mosaic.version = 11 : i64} {
  func.func @_l1_small_kernel(%arg0: i32, %arg1: memref<16x128xf32, #tpu.memory_space<vmem>>, %arg2: memref<16x128xf32, #tpu.memory_space<vmem>>, %arg3: memref<1x128xf32, #tpu.memory_space<vmem>>) attributes {dimension_semantics = [#tpu.dimension_semantics<arbitrary>], iteration_bounds = array<i64: 1>, scalar_prefetch = 0 : i64, scratch_operands = 0 : i64, tpu.core_type = #tpu.core_type<tc>, window_params = [{pipeline_mode = #tpu.pipeline_mode<synchronous>, transform_indices = @transform_0, window_bounds = array<i64: 16, 128>}, {pipeline_mode = #tpu.pipeline_mode<synchronous>, transform_indices = @transform_1, window_bounds = array<i64: 16, 128>}, {pipeline_mode = #tpu.pipeline_mode<synchronous>, transform_indices = @transform_2, window_bounds = array<i64: 1, 128>}]} {
    %c0 = arith.constant 0 : index
    %c0_0 = arith.constant 0 : index
    %0 = vector.load %arg1[%c0, %c0_0] : memref<16x128xf32, #tpu.memory_space<vmem>>, vector<16x128xf32>
    %c0_1 = arith.constant 0 : index
    %c0_2 = arith.constant 0 : index
    %1 = vector.load %arg2[%c0_1, %c0_2] : memref<16x128xf32, #tpu.memory_space<vmem>>, vector<16x128xf32>
    %2 = arith.subf %0, %1 : vector<16x128xf32>
    %3 = math.absf %2 : vector<16x128xf32>
    %cst = arith.constant dense<0.000000e+00> : vector<128xf32>
    %4 = vector.multi_reduction <add>, %3, %cst [0] : vector<16x128xf32> to vector<128xf32>
    %5 = vector.shape_cast %4 : vector<128xf32> to vector<1x128xf32>
    %c0_3 = arith.constant 0 : index
    %c0_4 = arith.constant 0 : index
    %6 = vector.load %arg3[%c0_3, %c0_4] : memref<1x128xf32, #tpu.memory_space<vmem>>, vector<1x128xf32>
    tpu.vector_store %arg3[%c0_3, %c0_4], %5 {strides = array<i32>} : memref<1x128xf32, #tpu.memory_space<vmem>>, vector<1x128xf32>,
    return
  }
  func.func @transform_0(%arg0: i32) -> (i32, i32) {
    %c0_i32 = arith.constant 0 : i32
    %c0_i32_0 = arith.constant 0 : i32
    %c0_i32_1 = arith.constant 0 : i32
    return %c0_i32, %c0_i32_0 : i32, i32
  }
  func.func @transform_1(%arg0: i32) -> (i32, i32) {
    %c0_i32 = arith.constant 0 : i32
    %c0_i32_0 = arith.constant 0 : i32
    %c0_i32_1 = arith.constant 0 : i32
    return %c0_i32, %c0_i32_0 : i32, i32
  }
  func.func @transform_2(%arg0: i32) -> (i32, i32) {
    %c0_i32 = arith.constant 0 : i32
    %c0_i32_0 = arith.constant 0 : i32
    %c0_i32_1 = arith.constant 0 : i32
    return %c0_i32, %c0_i32_0 : i32, i32
  }
}

</mosaic_0001>

<llo_original>
// kernel: tpu_custom_call.1
$region0: #{tpu_custom_call.1}
  #allocation0 [shape = 'u32[]', space=smem, size = 0x4, offset = 0x4, fixed_abs, tag = 'smem constant byte address 0x4 - core index']
  #allocation1 [shape = 'u32[144,128]{1,0:T(1,128)}', space=vmem, size = 0x12000, scoped, tag = 'internal scratch']
  %s0 = inlined_call_operand.hbm [shape: f32[16,128], index: 0, kind: input, shape index: {}]
  %s1 = inlined_call_operand.hbm [shape: f32[16,128], index: 1, kind: input, shape index: {}]
  %s2 = inlined_call_operand.hbm [shape: f32[1,128], index: 2, kind: output, shape index: {}]
  %s3 = sld [smem:[#allocation0]]
  $region26: #{tpu_custom_call.1} parent=0
    _
  %s5 = ssub.s32 1, %s3
  %s6 = scalar_select 0, %s5, %s3
  $region1: #{tpu_custom_call.1} parent=0
    #allocation2 [shape = 'u8[8192]{0}', space=vmem, size = 0x2000, scoped, tag = 'input window, operand 0, single buffered']
    #allocation3 [shape = 's32[1]{0}', space=sflag, size = 0x4, scoped, tag = 'scoped memory for tpu_custom_call.1']
    #allocation4 [shape = 's32[1]{0}', space=sflag, size = 0x4, scoped, tag = 'scoped memory for tpu_custom_call.1']
    #allocation5 [shape = 'u8[8192]{0}', space=vmem, size = 0x2000, scoped, tag = 'input window, operand 1, single buffered']
    #allocation6 [shape = 's32[1]{0}', space=sflag, size = 0x4, scoped, tag = 'scoped memory for tpu_custom_call.1']
    #allocation7 [shape = 'u8[512]{0}', space=vmem, size = 0x400, scoped, tag = 'output window, operand 0, single buffered']
    %7 = vsyncpa [#allocation3], 0
    %8 = vsyncpa [#allocation6], 0
    %9 = vsyncpa [#allocation4], 0
    // Predicated region
    $region2: #{tpu_custom_call.1} parent=1 // pred_check
      _
    $region3: #{tpu_custom_call.1} parent=1 // pred_check_branch
      %11 = sbr.rel (0) target = $region5
    $region4: #{tpu_custom_call.1} parent=1 // pred_region
      %s13 = ssub.s32 256, 256
      %14 = vsyncadd [#allocation3], %s13
      %s15 = sshll.u32 [#allocation2], 4
      %s16 = int_to_ptr.vmem [resolvable:$true] %s15
      %21 = dma.hbm_to_vmem [thread:$0]  %s0, 256, %s16, [#allocation3], 128, 128, 8
    $region5: #{tpu_custom_call.1} parent=1 // pred_fallthru
      _
    // Predicated region
    $region6: #{tpu_custom_call.1} parent=1 // pred_check
      _
    $region7: #{tpu_custom_call.1} parent=1 // pred_check_branch
      %23 = sbr.rel (0) target = $region9
    $region8: #{tpu_custom_call.1} parent=1 // pred_region
      %s25 = ssub.s32 256, 256
      %26 = vsyncadd [#allocation6], %s25
      %s27 = sshll.u32 [#allocation5], 4
      %s28 = int_to_ptr.vmem [resolvable:$true] %s27
      %33 = dma.hbm_to_vmem [thread:$0]  %s1, 256, %s28, [#allocation6], 128, 128, 8
    $region9: #{tpu_custom_call.1} parent=1 // pred_fallthru
      _
    // Predicated region
    $region10: #{tpu_custom_call.1} parent=1 // pred_check
      _
    $region11: #{tpu_custom_call.1} parent=1 // pred_check_branch
      %35 = sbr.rel (0) target = $region13
    $region12: #{tpu_custom_call.1} parent=1 // pred_region
      %36 = dma.done [#allocation3], 256
    $region13: #{tpu_custom_call.1} parent=1 // pred_fallthru
      _
    // Predicated region
    $region14: #{tpu_custom_call.1} parent=1 // pred_check
      _
    $region15: #{tpu_custom_call.1} parent=1 // pred_check_branch
      %38 = sbr.rel (0) target = $region17
    $region16: #{tpu_custom_call.1} parent=1 // pred_region
      %39 = dma.done [#allocation6], 256
    $region17: #{tpu_custom_call.1} parent=1 // pred_fallthru
      _
    %v40 = vld [vmem:[#allocation2] sm:$0xff]
    %v41 = vld [vmem:[#allocation2 + $0x8] sm:$0xff]
    %v42 = vld [vmem:[#allocation5] sm:$0xff]
    %v43 = vld [vmem:[#allocation5 + $0x8] sm:$0xff]
    %v44 = vsub.f32 %v40, %v42
    %v45 = vsub.f32 %v41, %v43
    %v46 = vand.u32 2147483647, %v44
    %v47 = vand.u32 2147483647, %v45
    %v48 = vadd.f32 %v46, %v47
    %v49 = vrot.slane %v48, 4
    %v50 = vadd.f32 %v48, %v49
    %v51 = vrot.slane %v50, 2
    %v52 = vadd.f32 %v50, %v51
    %v53 = vrot.slane %v52, 1
    %v54 = vadd.f32 %v52, %v53
    %55 = vst [vmem:[#allocation7] sm:$0x1] %v54
    // Predicated region
    $region18: #{tpu_custom_call.1} parent=1 // pred_check
      _
    $region19: #{tpu_custom_call.1} parent=1 // pred_check_branch
      %57 = sbr.rel (0) target = $region21
    $region20: #{tpu_custom_call.1} parent=1 // pred_region
      %s59 = ssub.s32 16, 16
      %60 = vsyncadd [#allocation4], %s59
      %s62 = sshll.u32 [#allocation7], 4
      %s63 = int_to_ptr.vmem [resolvable:$true] %s62
      %65 = dma.vmem_to_hbm [thread:$0]  %s63, 16, %s2, [#allocation4]
    $region21: #{tpu_custom_call.1} parent=1 // pred_fallthru
      _
    // Predicated region
    $region22: #{tpu_custom_call.1} parent=1 // pred_check
      _
    $region23: #{tpu_custom_call.1} parent=1 // pred_check_branch
      %67 = sbr.rel (0) target = $region25
    $region24: #{tpu_custom_call.1} parent=1 // pred_region
      %68 = dma.done [#allocation4], 16
    $region25: #{tpu_custom_call.1} parent=1 // pred_fallthru
      _
    %69 = vsyncpa [#allocation3], 1
    %70 = vsyncpa [#allocation6], 1
    %71 = vsyncpa [#allocation4], 1

</llo_original>
